<compile_context>
chip_gen: v6e
topology: v6e:2x2x1
jax: 0.10.0
libtpu: 0.0.40
codegen_flags: <defaults>
</compile_context>

<pallas_src>
import numpy as np
import jax
import jax.numpy as jnp
from jax import lax
from jax.experimental import pallas as pl
from jax.experimental.pallas import tpu as pltpu

_VMEM_LIMIT = 40 * 1024 * 1024   # safe on v5e/v6e (128 MiB) and v7x (64 MiB)
_LEAKY_SLOPE = 0.01              # nn.LeakyReLU() default
_BN_EPS = 1e-5                   # nn.BatchNorm2d default


# ---------------------------------------------------------------------------
# Pallas kernels
# ---------------------------------------------------------------------------
def _conv_tile(x_ref, w_ref):
    """3x3 conv on one row tile as a single (rt*W, 9Cin) @ (9Cin, Cp) bf16 GEMM."""
    rt, w, k9 = x_ref.shape
    x2 = x_ref[...].reshape(rt * w, k9)
    return jnp.dot(x2, w_ref[...], preferred_element_type=jnp.float32)


def _bn_stats_kernel(x_ref, w_ref, sum_ref, sq_ref):
    """Pass 1: accumulate per-channel sum / sum-of-squares of the conv output.

    Grid is (n_par, tiles_per_core); the output accumulator block depends only
    on the parallel axis, so each core owns its own (8, Cp) partial row block.
    """
    @pl.when(pl.program_id(1) == 0)
    def _init():
        sum_ref[...] = jnp.zeros_like(sum_ref)
        sq_ref[...] = jnp.zeros_like(sq_ref)

    acc = _conv_tile(x_ref, w_ref)                         # (rt*W, Cp) f32
    # TODO(synk): single-pass E[x^2]-E[x]^2 can cancel for very large B*H*W;
    # switch to per-tile (count, sum, sumsq) partials combined pairwise if
    # stricter BN-stat accuracy is required.
    sum_ref[0:1, :] += jnp.sum(acc, axis=0, keepdims=True)
    sq_ref[0:1, :] += jnp.sum(acc * acc, axis=0, keepdims=True)


def _feature_kernel(x_ref, w_ref, scale_ref, shift_ref, wd_ref, bd_ref, o_ref):
    """Pass 2: conv -> folded BN -> LeakyReLU -> 1x1 desc GEMM -> L2 normalize.

    Emits the descriptors directly in cost-kernel layout: (rt, Chid, Wp) with
    W on lanes (zero padded to Wp) and channels on sublanes -> dense stores.
    """
    rt, w, _ = x_ref.shape
    chid = o_ref.shape[1]
    wp = o_ref.shape[2]

    acc = _conv_tile(x_ref, w_ref)                         # (rt*W, Cp) f32
    h = acc * scale_ref[...] + shift_ref[...]              # folded BatchNorm
    h = jnp.where(h > 0, h, _LEAKY_SLOPE * h)              # LeakyReLU
    d = jnp.dot(h.astype(jnp.bfloat16), wd_ref[...],
                preferred_element_type=jnp.float32) + bd_ref[...]
    ss = jnp.sum(d * d, axis=-1, keepdims=True)            # torch.norm(x,2,1,True)
    dn = d * lax.rsqrt(jnp.maximum(ss, 1e-24))             # tiny floor vs /0

    # layout plumbing, in-kernel: (rt*W, Cp) -> (rt, Chid, W), pad lanes to Wp
    dt = jnp.transpose(dn[:, :chid].reshape(rt, w, chid), (0, 2, 1))
    if w == wp:
        o_ref[...] = dt.astype(o_ref.dtype)
    else:
        w_floor = (w // 128) * 128
        # zero only the partial tail vreg region, then dense-store the data
        o_ref[:, :, w_floor:] = jnp.zeros((rt, chid, wp - w_floor), o_ref.dtype)
        o_ref[:, :, :w] = dt.astype(o_ref.dtype)


def _cost_volume_kernel(x_ref, y_ref, o_ref):
    # x_ref, y_ref: (h_tile, C, Wp) bf16 descriptors, W on lanes / C on sublanes
    # o_ref       : (D, h_tile, Wp) f32 lane-dense cost volume
    x = x_ref[...].astype(jnp.float32)
    y = y_ref[...].astype(jnp.float32)
    wp = x.shape[-1]
    col = lax.broadcasted_iota(jnp.int32, (1, wp), 1)      # hoisted, reused for all d
    # NOTE: unrolled Python loop is fine for D ~ O(10); switch to pl.loop for
    # very large max_disparity.  bf16 multiplies are a further v6e/v7x option.
    for d in range(o_ref.shape[0]):
        ys = y if d == 0 else pltpu.roll(y, shift=d, axis=2)
        s = jnp.sum(x * ys, axis=1)                        # (ht, Wp), reduce over C
        # disparity mask applied AFTER the channel reduction (C-times cheaper)
        o_ref[d] = s if d == 0 else jnp.where(col >= d, s, 0.0)


# ---------------------------------------------------------------------------
# Tile sizing (VMEM arithmetic, not fixed targets)
# ---------------------------------------------------------------------------
def _pick_row_tile(n_rows, w, cp, k9, chid, wp, budget_bytes=20 * 1024 * 1024):
    # f32 intermediates (~4x rt*W*Cp) + double-buffered bf16 rows + bf16 output
    per_row = w * cp * 16 + w * k9 * 4 + chid * wp * 6 + 1
    t = max(1, min(n_rows, budget_bytes // per_row))
    while n_rows % t:
        t -= 1
    return t


def _pick_h_tile(h, wp, chid, num_disp, budget_bytes=16 * 1024 * 1024):
    # double-buffered bf16 x/y blocks + double-buffered f32 output block
    per_row = 2 * (2 * chid * wp * 2) + 2 * num_disp * wp * 4 + 1
    target = max(8, min(h, budget_bytes // per_row))
    for t in range(min(h, target), 0, -1):
        if h % t == 0 and (t % 8 == 0 or t == h):
            return t
    return h


# ---------------------------------------------------------------------------
# Wrapper
# ---------------------------------------------------------------------------
def attention_cost_volume(imL, imR, w_conv, gamma, beta, w_desc, b_desc,
                          max_disparity, row_tile=None, h_tile=None):
    """imL, imR: NCHW float32.  Returns (1, 1, D*B, H, W) like the PyTorch module."""
    B, Cin, H, W = imL.shape
    Chid = w_conv.shape[-1]
    num_disp = max_disparity // 4 + 1          # CostVolume(max_disparity//4).maxdisp
    Cp = -(-Chid // 128) * 128                 # channel padding -> full 128 lanes
    Wp = -(-W // 128) * 128                    # lane-dense W for cost/descriptors
    K9 = 9 * Cin
    n_rows = B * H

    rt = row_tile or _pick_row_tile(n_rows, W, Cp, K9, Chid, Wp)
    ht = h_tile or _pick_h_tile(H, Wp, Chid, num_disp)
    assert n_rows % rt == 0 and H % ht == 0

    n_tiles = n_rows // rt
    n_par = 2 if (n_tiles % 2 == 0 and n_tiles >= 2) else 1   # megacore split (v7x)
    tpp = n_tiles // n_par

    # parameters in kernel layout (bf16 MXU operands, f32 elsewhere) ----------
    # w_conv is HWIO (ky, kx, Cin, Chid); flatten ky-major to match im2col rows
    wk = jnp.pad(w_conv.reshape(K9, Chid),
                 ((0, 0), (0, Cp - Chid))).astype(jnp.bfloat16)
    wd = jnp.pad(w_desc, ((0, Cp - Chid), (0, Cp - Chid))).astype(jnp.bfloat16)
    gp = jnp.pad(gamma, (0, Cp - Chid)).reshape(1, Cp).astype(jnp.float32)
    bp = jnp.pad(beta, (0, Cp - Chid)).reshape(1, Cp).astype(jnp.float32)
    bd = jnp.pad(b_desc, (0, Cp - Chid)).reshape(1, Cp).astype(jnp.float32)

    def rows_of(im_nchw):
        # (B,Cin,H,W) -> full im2col rows (B*H, W, 9*Cin), bf16 (single conv GEMM)
        x = jnp.transpose(im_nchw, (0, 2, 3, 1))
        xp = jnp.pad(x, ((0, 0), (1, 1), (1, 1), (0, 0)))
        taps = [xp[:, ky:ky + H, kx:kx + W, :] for ky in range(3) for kx in range(3)]
        r = jnp.concatenate(taps, axis=-1)                 # (B, H, W, 9*Cin)
        return r.reshape(n_rows, W, K9).astype(jnp.bfloat16)

    row_spec_f = pl.BlockSpec((rt, W, K9), lambda t: (t, 0, 0))
    row_spec_s = pl.BlockSpec((rt, W, K9), lambda c, t: (c * tpp + t, 0, 0))
    wk_spec_f = pl.BlockSpec((K9, Cp), lambda t: (0, 0))
    wk_spec_s = pl.BlockSpec((K9, Cp), lambda c, t: (0, 0))
    vec_spec_f = pl.BlockSpec((1, Cp), lambda t: (0, 0))
    acc_spec_s = pl.BlockSpec((8, Cp), lambda c, t: (c, 0))

    stats_call = pl.pallas_call(
        _bn_stats_kernel,
        grid=(n_par, tpp),
        in_specs=[row_spec_s, wk_spec_s],
        out_specs=[acc_spec_s, acc_spec_s],
        out_shape=[jax.ShapeDtypeStruct((n_par * 8, Cp), jnp.float32)] * 2,
        compiler_params=pltpu.CompilerParams(
            dimension_semantics=("parallel", "arbitrary"),
            vmem_limit_bytes=_VMEM_LIMIT),
    )
    feat_call = pl.pallas_call(
        _feature_kernel,
        grid=(n_tiles,),
        in_specs=[row_spec_f, wk_spec_f, vec_spec_f, vec_spec_f,
                  pl.BlockSpec((Cp, Cp), lambda t: (0, 0)), vec_spec_f],
        out_specs=pl.BlockSpec((rt, Chid, Wp), lambda t: (t, 0, 0)),
        out_shape=jax.ShapeDtypeStruct((n_rows, Chid, Wp), jnp.bfloat16),
        compiler_params=pltpu.CompilerParams(
            dimension_semantics=("parallel",), vmem_limit_bytes=_VMEM_LIMIT),
    )

    def descriptors(im_nchw):
        rows = rows_of(im_nchw)
        s_part, q_part = stats_call(rows, wk)              # (n_par*8, Cp) partials
        cnt = float(B * H * W)
        mean = jnp.sum(s_part, axis=0, keepdims=True) / cnt
        msq = jnp.sum(q_part, axis=0, keepdims=True) / cnt
        var = jnp.maximum(msq - mean * mean, 0.0)          # biased var (train-mode BN)
        scale = gp / jnp.sqrt(var + _BN_EPS)
        shift = bp - mean * scale
        d = feat_call(rows, wk, scale, shift, wd, bd)      # (B*H, Chid, Wp) bf16
        return d.reshape(B, H, Chid, Wp)                   # free leading-dim split

    xn = descriptors(imL)   # conv/BN/desc share weights; BN stats are per call
    yn = descriptors(imR)

    cost = pl.pallas_call(
        _cost_volume_kernel,
        grid=(B, H // ht),
        in_specs=[pl.BlockSpec((None, ht, Chid, Wp), lambda b, h: (b, h, 0, 0)),
                  pl.BlockSpec((None, ht, Chid, Wp), lambda b, h: (b, h, 0, 0))],
        out_specs=pl.BlockSpec((num_disp, None, ht, Wp), lambda b, h: (0, b, h, 0)),
        out_shape=jax.ShapeDtypeStruct((num_disp, B, H, Wp), jnp.float32),
        compiler_params=pltpu.CompilerParams(
            dimension_semantics=("parallel", "parallel"),
            vmem_limit_bytes=_VMEM_LIMIT),
    )(xn, yn)[..., :W]                                     # drop the W lane padding

    # torch: cat of D tensors (1,B,H,W) along dim 1, then unsqueeze(0);
    # cost is already (D, B, H, W) so this is a pure reshape (no transpose).
    return cost.reshape(1, 1, num_disp * B, H, W)


# ---------------------------------------------------------------------------
# Pure-JAX reference (mirrors the PyTorch code) for verification
# ---------------------------------------------------------------------------
def reference_forward(imL, imR, w_conv, gamma, beta, w_desc, b_desc, max_disparity):
    num_disp = max_disparity // 4 + 1

    def feat(im_nchw):
        x = lax.conv_general_dilated(
            jnp.transpose(im_nchw, (0, 2, 3, 1)), w_conv, (1, 1), "SAME",
            dimension_numbers=("NHWC", "HWIO", "NHWC"),
            precision=lax.Precision.HIGHEST)
        mean = jnp.mean(x, axis=(0, 1, 2), keepdims=True)
        var = jnp.mean((x - mean) ** 2, axis=(0, 1, 2), keepdims=True)
        x = (x - mean) / jnp.sqrt(var + _BN_EPS) * gamma + beta
        x = jnp.where(x > 0, x, _LEAKY_SLOPE * x)
        d = jnp.einsum("bhwi,io->bhwo", x, w_desc,
                       precision=lax.Precision.HIGHEST) + b_desc
        d = d / jnp.sqrt(jnp.sum(d * d, axis=-1, keepdims=True))
        return jnp.transpose(d, (0, 3, 1, 2))   # NCHW

    x, y = feat(imL), feat(imR)
    costs = [jnp.sum(x * y, axis=1)[None]]
    for i in range(1, num_disp):
        corr = jnp.sum(x[:, :, :, i:] * y[:, :, :, :-i], axis=1)[None]
        costs.append(jnp.pad(corr, ((0, 0), (0, 0), (0, 0), (i, 0))))
    return jnp.concatenate(costs, axis=1)[None]


if __name__ == "__main__":
    B, Cin, H, W = 2, 4, 16, 16
    Chid = 32
    max_disparity = 16                      # -> 5 disparity planes (0..4)

    key = jax.random.PRNGKey(0)
    k = jax.random.split(key, 5)
    # Deterministic synthetic parameters (shapes as in the module's __init__)
    w_conv = jax.random.normal(k[0], (3, 3, Cin, Chid), jnp.float32) / np.sqrt(9 * Cin)
    gamma = jnp.ones((Chid,), jnp.float32)   # BatchNorm2d default init
    beta = jnp.zeros((Chid,), jnp.float32)
    w_desc = jax.random.normal(k[1], (Chid, Chid), jnp.float32) / np.sqrt(Chid)
    b_desc = 0.1 * jax.random.normal(k[2], (Chid,), jnp.float32)

    imL = jax.random.normal(k[3], (B, Cin, H, W), jnp.float32)
    imR = jax.random.normal(k[4], (B, Cin, H, W), jnp.float32)

    # row_tile=8 exercises the multi-tile accumulation + 2-way parallel stats path
    out = attention_cost_volume(imL, imR, w_conv, gamma, beta, w_desc, b_desc,
                                max_disparity, row_tile=8)
    jax.block_until_ready(out)

    ref = reference_forward(imL, imR, w_conv, gamma, beta, w_desc, b_desc,
                            max_disparity)
    assert out.shape == (1, 1, (max_disparity // 4 + 1) * B, H, W), out.shape
    # bf16 MXU operands (f32 accumulation) -> slightly looser tolerance than f32
    np.testing.assert_allclose(np.asarray(out), np.asarray(ref),
                               atol=2e-2, rtol=2e-2)
    print("KERNEL_OK")
</pallas_src>

<mosaic_0001>
module attributes {stable_mosaic.version = 11 : i64} {
  func.func @_bn_stats_kernel(%arg0: i32, %arg1: i32, %arg2: memref<8x16x36xbf16, #tpu.memory_space<vmem>>, %arg3: memref<36x128xbf16, #tpu.memory_space<vmem>>, %arg4: memref<8x128xf32, #tpu.memory_space<vmem>>, %arg5: memref<8x128xf32, #tpu.memory_space<vmem>>) attributes {dimension_semantics = [#tpu.dimension_semantics<parallel>, #tpu.dimension_semantics<arbitrary>], iteration_bounds = array<i64: 2, 2>, scalar_prefetch = 0 : i64, scratch_operands = 0 : i64, tpu.core_type = #tpu.core_type<tc>, window_params = [{transform_indices = @transform_0, window_bounds = array<i64: 8, 16, 36>}, {pipeline_mode = #tpu.pipeline_mode<synchronous>, transform_indices = @transform_1, window_bounds = array<i64: 36, 128>}, {transform_indices = @transform_2, window_bounds = array<i64: 8, 128>}, {transform_indices = @transform_3, window_bounds = array<i64: 8, 128>}]} {
    %c0_i32 = arith.constant 0 : i32
    %0 = arith.cmpi eq, %arg1, %c0_i32 : i32
    %1 = arith.extui %0 : i1 to i32
    %c0_i32_0 = arith.constant 0 : i32
    %2 = arith.cmpi ne, %1, %c0_i32_0 : i32
    scf.if %2 {
      %cst_15 = arith.constant 0.000000e+00 : f32
      %18 = vector.broadcast %cst_15 : f32 to vector<8x128xf32>
      %c0_16 = arith.constant 0 : index
      %c0_17 = arith.constant 0 : index
      %19 = vector.load %arg4[%c0_16, %c0_17] : memref<8x128xf32, #tpu.memory_space<vmem>>, vector<8x128xf32>
      tpu.vector_store %arg4[%c0_16, %c0_17], %18 {strides = array<i32>} : memref<8x128xf32, #tpu.memory_space<vmem>>, vector<8x128xf32>,
      %cst_18 = arith.constant 0.000000e+00 : f32
      %20 = vector.broadcast %cst_18 : f32 to vector<8x128xf32>
      %c0_19 = arith.constant 0 : index
      %c0_20 = arith.constant 0 : index
      %21 = vector.load %arg5[%c0_19, %c0_20] : memref<8x128xf32, #tpu.memory_space<vmem>>, vector<8x128xf32>
      tpu.vector_store %arg5[%c0_19, %c0_20], %20 {strides = array<i32>} : memref<8x128xf32, #tpu.memory_space<vmem>>, vector<8x128xf32>,
    } else {
    }
    %c0 = arith.constant 0 : index
    %c0_1 = arith.constant 0 : index
    %c0_2 = arith.constant 0 : index
    %3 = vector.load %arg2[%c0, %c0_1, %c0_2] : memref<8x16x36xbf16, #tpu.memory_space<vmem>>, vector<8x16x36xbf16>
    %4 = vector.shape_cast %3 : vector<8x16x36xbf16> to vector<128x36xbf16>
    %c0_3 = arith.constant 0 : index
    %c0_4 = arith.constant 0 : index
    %5 = vector.load %arg3[%c0_3, %c0_4] : memref<36x128xbf16, #tpu.memory_space<vmem>>, vector<36x128xbf16>
    %cst = arith.constant dense<0.000000e+00> : vector<128x128xf32>
    %6 = tpu.matmul %4, %5, %cst {dimension_numbers = #tpu.dot_dimension_numbers<[1], [0], [0], [1], [0, 0, 1, 1], [], []>} : vector<128x36xbf16>, vector<36x128xbf16>, vector<128x128xf32> -> vector<128x128xf32>
    %c0_5 = arith.constant 0 : index
    %c0_6 = arith.constant 0 : index
    %7 = vector.load %arg4[%c0_5, %c0_6] : memref<8x128xf32, #tpu.memory_space<vmem>>, vector<1x128xf32>
    %cst_7 = arith.constant dense<0.000000e+00> : vector<128xf32>
    %8 = vector.multi_reduction <add>, %6, %cst_7 [0] : vector<128x128xf32> to vector<128xf32>
    %9 = vector.shape_cast %8 : vector<128xf32> to vector<1x128xf32>
    %10 = arith.addf %7, %9 : vector<1x128xf32>
    %c0_8 = arith.constant 0 : index
    %c0_9 = arith.constant 0 : index
    %11 = vector.load %arg4[%c0_8, %c0_9] : memref<8x128xf32, #tpu.memory_space<vmem>>, vector<1x128xf32>
    tpu.vector_store %arg4[%c0_8, %c0_9], %10 {strides = array<i32>} : memref<8x128xf32, #tpu.memory_space<vmem>>, vector<1x128xf32>,
    %c0_10 = arith.constant 0 : index
    %c0_11 = arith.constant 0 : index
    %12 = vector.load %arg5[%c0_10, %c0_11] : memref<8x128xf32, #tpu.memory_space<vmem>>, vector<1x128xf32>
    %13 = arith.mulf %6, %6 : vector<128x128xf32>
    %cst_12 = arith.constant dense<0.000000e+00> : vector<128xf32>
    %14 = vector.multi_reduction <add>, %13, %cst_12 [0] : vector<128x128xf32> to vector<128xf32>
    %15 = vector.shape_cast %14 : vector<128xf32> to vector<1x128xf32>
    %16 = arith.addf %12, %15 : vector<1x128xf32>
    %c0_13 = arith.constant 0 : index
    %c0_14 = arith.constant 0 : index
    %17 = vector.load %arg5[%c0_13, %c0_14] : memref<8x128xf32, #tpu.memory_space<vmem>>, vector<1x128xf32>
    tpu.vector_store %arg5[%c0_13, %c0_14], %16 {strides = array<i32>} : memref<8x128xf32, #tpu.memory_space<vmem>>, vector<1x128xf32>,
    return
  }
  func.func @transform_0(%arg0: i32, %arg1: i32) -> (i32, i32, i32) {
    %c2_i32 = arith.constant 2 : i32
    %0 = arith.muli %arg0, %c2_i32 : i32
    %1 = arith.addi %0, %arg1 : i32
    %c0_i32 = arith.constant 0 : i32
    %c0_i32_0 = arith.constant 0 : i32
    %c0_i32_1 = arith.constant 0 : i32
    return %1, %c0_i32, %c0_i32_0 : i32, i32, i32
  }
  func.func @transform_1(%arg0: i32, %arg1: i32) -> (i32, i32) {
    %c0_i32 = arith.constant 0 : i32
    %c0_i32_0 = arith.constant 0 : i32
    %c0_i32_1 = arith.constant 0 : i32
    return %c0_i32, %c0_i32_0 : i32, i32
  }
  func.func @transform_2(%arg0: i32, %arg1: i32) -> (i32, i32) {
    %c0_i32 = arith.constant 0 : i32
    %c0_i32_0 = arith.constant 0 : i32
    return %arg0, %c0_i32 : i32, i32
  }
  func.func @transform_3(%arg0: i32, %arg1: i32) -> (i32, i32) {
    %c0_i32 = arith.constant 0 : i32
    %c0_i32_0 = arith.constant 0 : i32
    return %arg0, %c0_i32 : i32, i32
  }
}

</mosaic_0001>

<llo_original>
// kernel: tpu_custom_call.1
$region0: #{tpu_custom_call.1}
  #allocation0 [shape = 'u32[]', space=smem, size = 0x4, offset = 0x4, fixed_abs, tag = 'smem constant byte address 0x4 - core index']
  #allocation1 [shape = 'u32[144,128]{1,0:T(1,128)}', space=vmem, size = 0x12000, scoped, tag = 'internal scratch']
  %s0 = inlined_call_operand.hbm [shape: bf16[32,16,36], index: 0, kind: input, shape index: {}]
  %s1 = inlined_call_operand.hbm [shape: bf16[36,128], index: 1, kind: input, shape index: {}]
  %s2 = inlined_call_operand.hbm [shape: f32[16,128], index: 2, kind: output, shape index: {0}]
  %s3 = inlined_call_operand.hbm [shape: f32[16,128], index: 3, kind: output, shape index: {1}]
  %4 = xla_tuple %s2, %s3
  %s5 = sld [smem:[#allocation0]]
  $region61: #{tpu_custom_call.1} parent=0
    _
  %s7 = ssub.s32 1, %s5
  %s8 = scalar_select 0, %s7, %s5
  $region1: #{tpu_custom_call.1} parent=0
    #allocation2 [shape = 'u8[65536]{0}', space=vmem, size = 0x10000, scoped, tag = 'input window, operand 0']
    #allocation3 [shape = 's32[2]{0}', space=sflag, size = 0x8, scoped, tag = 'scoped memory for tpu_custom_call.1']
    #allocation4 [shape = 's32[2]{0}', space=sflag, size = 0x8, scoped, tag = 'scoped memory for tpu_custom_call.1']
    #allocation5 [shape = 'u8[10240]{0}', space=vmem, size = 0x2800, scoped, tag = 'input window, operand 1, single buffered']
    #allocation6 [shape = 's32[1]{0}', space=sflag, size = 0x4, scoped, tag = 'scoped memory for tpu_custom_call.1']
    #allocation7 [shape = 'u8[8192]{0}', space=vmem, size = 0x2000, scoped, tag = 'output window, operand 0']
    #allocation8 [shape = 'u8[8192]{0}', space=vmem, size = 0x2000, scoped, tag = 'output window, operand 1']
    #allocation9 [shape = 's32[2]{0}', space=sflag, size = 0x8, scoped, tag = 'scoped memory for tpu_custom_call.1']
    %9 = vsyncpa [#allocation3], 0
    %s10 = scalar_lea.sflag [#allocation3], 1
    %11 = vsyncpa %s10, 0
    %12 = vsyncpa [#allocation6], 0
    %13 = vsyncpa [#allocation4], 0
    %s14 = scalar_lea.sflag [#allocation4], 1
    %15 = vsyncpa %s14, 0
    %16 = vsyncpa [#allocation9], 0
    %s17 = scalar_lea.sflag [#allocation9], 1
    %18 = vsyncpa %s17, 0
    loop: start=0, step=1, limit=6
    $region2: #{tpu_custom_call.1} parent=1 // loop_pre_header
      _
    $region3: #{tpu_custom_call.1} parent=1 // loop_header
      %s20 = sphi 0, %s24
      %p21 = scmp.ge.s32.totalorder %s20, 6
      %s27 = sphi 0, %s39
      %s28 = sphi 0, %s35
      %s29 = sphi 0, %s27
      %s30 = sphi 0, %s28
      %s31 = sphi 0, %s29
      %s32 = sphi 0, %s30
      %s46 = sphi 0, %s48
      %s49 = sphi 0, %s46
      %s50 = sphi 0, %s49
      %s66 = sphi 0, %s50
      %s70 = sphi 0, %s70
      %s72 = sphi 0, %s70
      %s73 = sphi 0, %s72
      %s87 = sphi 0, %s73
      %s93 = sphi 0, %s95
      %s96 = sphi 0, %s93
      %s97 = sphi 0, %s96
      %s113 = sphi 0, %s97
      %s119 = sphi 0, %s121
      %s122 = sphi 0, %s119
      %s123 = sphi 0, %s122
      %s139 = sphi 0, %s123
    $region4: #{tpu_custom_call.1} parent=1 // loop_header_branch
      %23 = sbr.rel (%p21) target = $region8
    $region5: #{tpu_custom_call.1} parent=1 // loop_body
      %s25 = ssub.s32 %s20, 1
      %s26 = ssub.s32 %s20, 2
      %s33 = sadd.s32 1, %s28
      %p34 = scmp.ge.s32.totalorder %s33, 2
      %s35 = scalar_select %p34, 0, %s33
      %s36 = sadd.s32 1, %s27
      %s37 = scalar_select %p34, %s36, %s27
      %p38 = scmp.ge.s32.totalorder %s37, 2
      %s39 = scalar_select %p38, 0, %s37
      %s40 = smul.u32 %s27, 2
      %s41 = sadd.s32 %s40, %s28
      %s42 = smul.u32 %s39, 2
      %s43 = sadd.s32 %s42, %s35
      %s44 = ssub.s32 %s41, %s43
      %p45 = scmp.eq.s32.totalorder %s44, 0
      %s47 = sadd.s32 %s46, 1
      %s48 = scalar_select %p45, %s46, %s47
      %p51 = pneg %p45
      %p52 = scmp.eq.s32.totalorder %s20, 3
      %p53 = por %p51, %p52
      %p54 = scmp.ne.s32.totalorder %s46, %s49
      %p55 = scmp.eq.s32.totalorder %s20, 0
      %p56 = por %p54, %p55
      %p57 = scmp.ne.s32.totalorder %s46, %s49
      %p58 = scmp.eq.s32.totalorder %s25, 3
      %p59 = por %p57, %p58
      %p60 = scmp.ne.s32.totalorder %s49, %s50
      %p61 = scmp.eq.s32.totalorder %s25, 0
      %p62 = por %p60, %p61
      %p63 = scmp.ne.s32.totalorder %s49, %s50
      %p64 = scmp.eq.s32.totalorder %s26, 3
      %p65 = por %p63, %p64
      %p67 = scmp.ne.s32.totalorder %s50, %s66
      %p68 = scmp.eq.s32.totalorder %s26, 0
      %p69 = por %p67, %p68
      %s71 = sadd.s32 %s70, 1
      %p74 = scmp.eq.s32.totalorder %s20, 3
      %p75 = scmp.ne.s32.totalorder %s70, %s72
      %p76 = scmp.eq.s32.totalorder %s20, 0
      %p77 = por %p75, %p76
      %p78 = scmp.ne.s32.totalorder %s70, %s72
      %p79 = scmp.eq.s32.totalorder %s25, 3
      %p80 = por %p78, %p79
      %p81 = scmp.ne.s32.totalorder %s72, %s73
      %p82 = scmp.eq.s32.totalorder %s25, 0
      %p83 = por %p81, %p82
      %p84 = scmp.ne.s32.totalorder %s72, %s73
      %p85 = scmp.eq.s32.totalorder %s26, 3
      %p86 = por %p84, %p85
      %p88 = scmp.ne.s32.totalorder %s73, %s87
      %p89 = scmp.eq.s32.totalorder %s26, 0
      %p90 = por %p88, %p89
      %s91 = ssub.s32 %s27, %s39
      %p92 = scmp.eq.s32.totalorder %s91, 0
      %s94 = sadd.s32 %s93, 1
      %s95 = scalar_select %p92, %s93, %s94
      %p98 = pneg %p92
      %p99 = scmp.eq.s32.totalorder %s20, 3
      %p100 = por %p98, %p99
      %p101 = scmp.ne.s32.totalorder %s93, %s96
      %p102 = scmp.eq.s32.totalorder %s20, 0
      %p103 = por %p101, %p102
      %p104 = scmp.ne.s32.totalorder %s93, %s96
      %p105 = scmp.eq.s32.totalorder %s25, 3
      %p106 = por %p104, %p105
      %p107 = scmp.ne.s32.totalorder %s96, %s97
      %p108 = scmp.eq.s32.totalorder %s25, 0
      %p109 = por %p107, %p108
      %p110 = scmp.ne.s32.totalorder %s96, %s97
      %p111 = scmp.eq.s32.totalorder %s26, 3
      %p112 = por %p110, %p111
      %p114 = scmp.ne.s32.totalorder %s97, %s113
      %p115 = scmp.eq.s32.totalorder %s26, 0
      %p116 = por %p114, %p115
      %s117 = ssub.s32 %s27, %s39
      %p118 = scmp.eq.s32.totalorder %s117, 0
      %s120 = sadd.s32 %s119, 1
      %s121 = scalar_select %p118, %s119, %s120
      %p124 = pneg %p118
      %p125 = scmp.eq.s32.totalorder %s20, 3
      %p126 = por %p124, %p125
      %p127 = scmp.ne.s32.totalorder %s119, %s122
      %p128 = scmp.eq.s32.totalorder %s20, 0
      %p129 = por %p127, %p128
      %p130 = scmp.ne.s32.totalorder %s119, %s122
      %p131 = scmp.eq.s32.totalorder %s25, 3
      %p132 = por %p130, %p131
      %p133 = scmp.ne.s32.totalorder %s122, %s123
      %p134 = scmp.eq.s32.totalorder %s25, 0
      %p135 = por %p133, %p134
      %p136 = scmp.ne.s32.totalorder %s122, %s123
      %p137 = scmp.eq.s32.totalorder %s26, 3
      %p138 = por %p136, %p137
      %p140 = scmp.ne.s32.totalorder %s123, %s139
      %p141 = scmp.eq.s32.totalorder %s26, 0
      %p142 = por %p140, %p141
      %p143 = scmp.le.s32.totalorder 1, %s20
      %p144 = scmp.lt.s32.totalorder %s20, 5
      %p145 = pnand %p143, %p144
      %p146 = pneg %p145
      // Predicated region
      $region9: #{tpu_custom_call.1} parent=5 // pred_check
        _
      $region10: #{tpu_custom_call.1} parent=5 // pred_check_branch
        %148 = sbr.rel (%p145) target = $region12
      $region11: #{tpu_custom_call.1} parent=5 // pred_region
        %s149 = ssub.s32 %s20, 1
        // Predicated region
        $region13: #{tpu_custom_call.1} parent=11 // pred_check
          %p150 = pneg %p83
        $region14: #{tpu_custom_call.1} parent=11 // pred_check_branch
          %152 = sbr.rel (%p150) target = $region16
        $region15: #{tpu_custom_call.1} parent=11 // pred_region
          %s154 = ssub.s32 320, 320
          %155 = vsyncadd [#allocation6], %s154
          %s156 = sshll.u32 [#allocation5], 4
          %s157 = int_to_ptr.vmem [resolvable:$true] %s156
          %162 = dma.hbm_to_vmem [thread:$0]  %s1, 320, %s157, [#allocation6], 64, 64, 4
        $region16: #{tpu_custom_call.1} parent=11 // pred_fallthru
          _
      $region12: #{tpu_custom_call.1} parent=5 // pred_fallthru
        _
      %p163 = scmp.lt.s32.totalorder %s20, 4
      // Predicated region
      $region17: #{tpu_custom_call.1} parent=5 // pred_check
        %p164 = pneg %p163
      $region18: #{tpu_custom_call.1} parent=5 // pred_check_branch
        %166 = sbr.rel (%p164) target = $region20
      $region19: #{tpu_custom_call.1} parent=5 // pred_region
        // Predicated region
        $region21: #{tpu_custom_call.1} parent=19 // pred_check
          %p167 = pneg %p56
        $region22: #{tpu_custom_call.1} parent=19 // pred_check_branch
          %169 = sbr.rel (%p167) target = $region24
        $region23: #{tpu_custom_call.1} parent=19 // pred_region
          %s170 = sand.u32 %s46, 1
          %s171 = scalar_lea.sflag [#allocation3], %s170
          %s172 = sand.u32 %s46, 1
          %s173 = smul.addr %s172, 64
          %s174 = scalar_lea.vmem [#allocation2], %s173
          %s175 = smul.u32 %s27, 2
          %s176 = sadd.s32 %s175, %s28
          %s177 = smul.u32 8, %s176
          %s179 = ssub.s32 1024, 1024
          %180 = vsyncadd %s171, %s179
          %s181 = smul.addr %s177, 2
          %s182 = smul.addr %s181, 64
          %s183 = scalar_lea.hbm %s0, %s182
          %s184 = sshll.u32 %s174, 4
          %s185 = int_to_ptr.vmem [resolvable:$true] %s184
          %190 = dma.hbm_to_vmem [thread:$0]  %s183, 1024, %s185, %s171, 64, 64, 4
        $region24: #{tpu_custom_call.1} parent=19 // pred_fallthru
          _
      $region20: #{tpu_custom_call.1} parent=5 // pred_fallthru
        _
      %p191 = scmp.le.s32.totalorder 1, %s20
      %p192 = scmp.lt.s32.totalorder %s20, 5
      %p193 = pnand %p191, %p192
      %p194 = pneg %p193
      // Predicated region
      $region25: #{tpu_custom_call.1} parent=5 // pred_check
        _
      $region26: #{tpu_custom_call.1} parent=5 // pred_check_branch
        %196 = sbr.rel (%p193) target = $region28
      $region27: #{tpu_custom_call.1} parent=5 // pred_region
        %s197 = ssub.s32 %s20, 1
        %s198 = sand.u32 %s49, 1
        %s199 = scalar_lea.sflag [#allocation3], %s198
        %s200 = sand.u32 %s49, 1
        %s201 = smul.addr %s200, 64
        %s202 = scalar_lea.vmem [#allocation2], %s201
        // Predicated region
        $region29: #{tpu_custom_call.1} parent=27 // pred_check
          %p203 = pneg %p62
        $region30: #{tpu_custom_call.1} parent=27 // pred_check_branch
          %205 = sbr.rel (%p203) target = $region32
        $region31: #{tpu_custom_call.1} parent=27 // pred_region
          %206 = dma.done %s199, 1024
        $region32: #{tpu_custom_call.1} parent=27 // pred_fallthru
          _
        // Predicated region
        $region33: #{tpu_custom_call.1} parent=27 // pred_check
          %p207 = pneg %p83
        $region34: #{tpu_custom_call.1} parent=27 // pred_check_branch
          %209 = sbr.rel (%p207) target = $region36
        $region35: #{tpu_custom_call.1} parent=27 // pred_region
          %210 = dma.done [#allocation6], 320
        $region36: #{tpu_custom_call.1} parent=27 // pred_fallthru
          _
        %s211 = sand.u32 %s49, 1
        %s212 = scalar_lea.sflag [#allocation3], %s211
        %s213 = sand.u32 %s49, 1
        %s214 = smul.addr %s213, 64
        %s215 = scalar_lea.vmem [#allocation2], %s214
        %p216 = pneg %p62
        %p217 = pneg %p59
        %p218 = pneg %p83
        %p219 = pneg %p80
        %p220 = pneg %p109
        %p221 = pneg %p106
        %s222 = sand.u32 %s96, 1
        %s223 = scalar_lea.sflag [#allocation4], %s222
        %s224 = sand.u32 %s96, 1
        %s225 = smul.addr %s224, 8
        %s226 = scalar_lea.vmem [#allocation7], %s225
        %p227 = pneg %p135
        %p228 = pneg %p132
        %s229 = sand.u32 %s122, 1
        %s230 = scalar_lea.sflag [#allocation9], %s229
        %s231 = sand.u32 %s122, 1
        %s232 = smul.addr %s231, 8
        %s233 = scalar_lea.vmem [#allocation8], %s232
        %s234 = smul.u32 %s29, 2
        %s235 = sadd.s32 %s234, %s30
        %s236 = smul.u32 8, %s235
        %p238 = scmp.eq.s32.totalorder %s30, 0
        // Predicated region
        $region37: #{tpu_custom_call.1} parent=27 // pred_check
          %p239 = pneg %p238
        $region38: #{tpu_custom_call.1} parent=27 // pred_check_branch
          %241 = sbr.rel (%p239) target = $region40
        $region39: #{tpu_custom_call.1} parent=27 // pred_region
          %242 = vst [vmem:[%s226] sm:$0xff] 0.0
          %243 = vst [vmem:[%s233] sm:$0xff] 0.0
        $region40: #{tpu_custom_call.1} parent=27 // pred_fallthru
          _
        %v244 = vld [vmem:[%s202] sm:$0xf]
        %v245 = vld [vmem:[%s202 + $0x4] sm:$0xf]
        %v246 = vld [vmem:[%s202 + $0x8] sm:$0xf]
        %v247 = vld [vmem:[%s202 + $0xc] sm:$0xf]
        %v248 = vld [vmem:[%s202 + $0x10] sm:$0xf]
        %v249 = vld [vmem:[%s202 + $0x14] sm:$0xf]
        %v250 = vld [vmem:[%s202 + $0x18] sm:$0xf]
        %v251 = vld [vmem:[%s202 + $0x1c] sm:$0xf]
        %v252 = vld [vmem:[%s202 + $0x20] sm:$0xf]
        %v253 = vld [vmem:[%s202 + $0x24] sm:$0xf]
        %v254 = vld [vmem:[%s202 + $0x28] sm:$0xf]
        %v255 = vld [vmem:[%s202 + $0x2c] sm:$0xf]
        %v256 = vld [vmem:[%s202 + $0x30] sm:$0xf]
        %v257 = vld [vmem:[%s202 + $0x34] sm:$0xf]
        %v258 = vld [vmem:[%s202 + $0x38] sm:$0xf]
        %v259 = vld [vmem:[%s202 + $0x3c] sm:$0xf]
        %v260 = vld [vmem:[#allocation5] sm:$0xf]
        %v261 = vld [vmem:[#allocation5 + $0x4] sm:$0xf]
        %v262 = vld [vmem:[#allocation5 + $0x8] sm:$0xf]
        %v263 = vld [vmem:[#allocation5 + $0xc] sm:$0xf]
        %v264 = vld [vmem:[#allocation5 + $0x10] sm:$0x3]
        %v281 = vunpack.c.l.b16 %v244
        %v282 = vunpack.c.l.b16 %v245
        %v283 = vunpack.c.l.b16 %v246
        %v284 = vunpack.c.l.b16 %v247
        %v285 = vunpack.c.l.b16 %v248
        %v286 = vunpack.c.l.b16 %v249
        %v287 = vunpack.c.l.b16 %v250
        %v288 = vunpack.c.l.b16 %v251
        %v289 = vunpack.c.l.b16 %v252
        %v290 = vunpack.c.l.b16 %v253
        %v291 = vunpack.c.l.b16 %v254
        %v292 = vunpack.c.l.b16 %v255
        %v293 = vunpack.c.l.b16 %v256
        %v294 = vunpack.c.l.b16 %v257
        %v295 = vunpack.c.l.b16 %v258
        %v296 = vunpack.c.l.b16 %v259
        %v297 = vpack.c.b16 %v282, %v281
        %v298 = vpack.c.b16 %v284, %v283
        %v299 = vpack.c.b16 %v286, %v285
        %v300 = vpack.c.b16 %v288, %v287
        %v301 = vpack.c.b16 %v290, %v289
        %v302 = vpack.c.b16 %v292, %v291
        %v303 = vpack.c.b16 %v294, %v293
        %v304 = vpack.c.b16 %v296, %v295
        %v310 = vunpack.c.l.b16 %v260
        %v311 = vunpack.c.l.b16 %v261
        %v312 = vunpack.c.l.b16 %v262
        %v313 = vunpack.c.l.b16 %v263
        %v314 = vunpack.c.l.b16 %v264
        %v315 = vpack.c.b16 %v311, %v310
        %v316 = vpack.c.b16 %v313, %v312
        %v317 = vpack.c.b16 %v314, %v314
        %vm320 = vcmask 293888
        %v322 = vsel %vm320, %v297, 0
        %v325 = vsel %vm320, %v298, 0
        %v328 = vsel %vm320, %v299, 0
        %v331 = vsel %vm320, %v300, 0
        %v334 = vsel %vm320, %v301, 0
        %v337 = vsel %vm320, %v302, 0
        %v340 = vsel %vm320, %v303, 0
        %v343 = vsel %vm320, %v304, 0
        %vm345 = vcmask 1041408
        %v347 = vsel %vm345, %v317, 0
        %349 = vmatprep.subr.bf16.mxu0 0
        %350 = vmatpush1.bf16.msra.mxu0 0
        %351 = vmatprep.subr.bf16.mxu0 0
        %352 = vmatpush1.bf16.msra.mxu0 0
        %353 = vmatprep.subr.bf16.mxu0 0
        %354 = vmatpush1.bf16.msra.mxu0 0
        %355 = vmatprep.subr.bf16.mxu0 0
        %356 = vmatpush1.bf16.msra.mxu0 0
        %357 = vmatprep.subr.bf16.mxu0 0
        %358 = vmatpush1.bf16.msra.mxu0 0
        %359 = vmatprep.subr.bf16.mxu0 0
        %360 = vmatpush1.bf16.msra.mxu0 %v347
        %361 = vmatprep.subr.bf16.mxu0 0
        %362 = vmatpush1.bf16.msra.mxu0 %v316
        %363 = vmatprep.subr.bf16.mxu0 0
        %364 = vmatpush1.bf16.msra.mxu0 %v315
        %365 = vmatprep.subr.bf16.mxu0 0
        %366 = vmatpush2.bf16.msra.mxu0 0
        %367 = vmatprep.subr.bf16.mxu0 0
        %368 = vmatpush2.bf16.msra.mxu0 0
        %369 = vmatprep.subr.bf16.mxu0 0
        %370 = vmatpush2.bf16.msra.mxu0 0
        %371 = vmatprep.subr.bf16.mxu0 0
        %372 = vmatpush2.bf16.msra.mxu0 0
        %373 = vmatprep.subr.bf16.mxu0 0
        %374 = vmatpush2.bf16.msra.mxu0 0
        %375 = vmatprep.subr.bf16.mxu0 0
        %376 = vmatpush2.bf16.msra.mxu0 0
        %377 = vmatprep.subr.bf16.mxu0 0
        %378 = vmatpush2.bf16.msra.mxu0 0
        %379 = vmatprep.subr.bf16.mxu0 0
        %380 = vmatpush2.bf16.msra.mxu0 0
        %381 = vmatprep.mubr.bf16.mxu0 0
        %382 = vmatmul.mubr.bf16.gmra.mxu0 %v322
        %v383 = vpop.f32.mrf.mxu0
        %v384 = vadd.f32 0.0, %v383
        %v385 = vpop.f32.mrf.mxu0
        %v386 = vpop.f32.mrf.mxu0
        %v387 = vadd.f32 0.0, %v386
        %v388 = vpop.f32.mrf.mxu0
        %389 = vmatprep.mubr.bf16.mxu0 0
        %390 = vmatmul.mubr.bf16.gmra.mxu0 %v325
        %v391 = vpop.f32.mrf.mxu0
        %v392 = vadd.f32 0.0, %v391
        %v393 = vpop.f32.mrf.mxu0
        %v394 = vpop.f32.mrf.mxu0
        %v395 = vadd.f32 0.0, %v394
        %v396 = vpop.f32.mrf.mxu0
        %397 = vmatprep.mubr.bf16.mxu0 0
        %398 = vmatmul.mubr.bf16.gmra.mxu0 %v328
        %v399 = vpop.f32.mrf.mxu0
        %v400 = vadd.f32 0.0, %v399
        %v401 = vpop.f32.mrf.mxu0
        %v402 = vpop.f32.mrf.mxu0
        %v403 = vadd.f32 0.0, %v402
        %v404 = vpop.f32.mrf.mxu0
        %405 = vmatprep.mubr.bf16.mxu0 0
        %406 = vmatmul.mubr.bf16.gmra.mxu0 %v331
        %v407 = vpop.f32.mrf.mxu0
        %v408 = vadd.f32 0.0, %v407
        %v409 = vpop.f32.mrf.mxu0
        %v410 = vpop.f32.mrf.mxu0
        %v411 = vadd.f32 0.0, %v410
        %v412 = vpop.f32.mrf.mxu0
        %413 = vmatprep.mubr.bf16.mxu0 0
        %414 = vmatmul.mubr.bf16.gmra.mxu0 %v334
        %v415 = vpop.f32.mrf.mxu0
        %v416 = vadd.f32 0.0, %v415
        %v417 = vpop.f32.mrf.mxu0
        %v418 = vpop.f32.mrf.mxu0
        %v419 = vadd.f32 0.0, %v418
        %v420 = vpop.f32.mrf.mxu0
        %421 = vmatprep.mubr.bf16.mxu0 0
        %422 = vmatmul.mubr.bf16.gmra.mxu0 %v337
        %v423 = vpop.f32.mrf.mxu0
        %v424 = vadd.f32 0.0, %v423
        %v425 = vpop.f32.mrf.mxu0
        %v426 = vpop.f32.mrf.mxu0
        %v427 = vadd.f32 0.0, %v426
        %v428 = vpop.f32.mrf.mxu0
        %429 = vmatprep.mubr.bf16.mxu0 0
        %430 = vmatmul.mubr.bf16.gmra.mxu0 %v340
        %v431 = vpop.f32.mrf.mxu0
        %v432 = vadd.f32 0.0, %v431
        %v433 = vpop.f32.mrf.mxu0
        %v434 = vpop.f32.mrf.mxu0
        %v435 = vadd.f32 0.0, %v434
        %v436 = vpop.f32.mrf.mxu0
        %437 = vmatprep.mubr.bf16.mxu0 0
        %438 = vmatmul.mubr.bf16.gmra.mxu0 %v343
        %v439 = vpop.f32.mrf.mxu0
        %v440 = vadd.f32 0.0, %v439
        %v441 = vpop.f32.mrf.mxu0
        %v442 = vpop.f32.mrf.mxu0
        %v443 = vadd.f32 0.0, %v442
        %v444 = vpop.f32.mrf.mxu0
        %445 = vdwg.mxu0
        %v446 = vld [vmem:[%s226] sm:$0x1]
        %v447 = vadd.f32 %v384, %v387
        %v448 = vadd.f32 %v447, %v392
        %v449 = vadd.f32 %v448, %v395
        %v450 = vadd.f32 %v449, %v400
        %v451 = vadd.f32 %v450, %v403
        %v452 = vadd.f32 %v451, %v408
        %v453 = vadd.f32 %v452, %v411
        %v454 = vadd.f32 %v453, %v416
        %v455 = vadd.f32 %v454, %v419
        %v456 = vadd.f32 %v455, %v424
        %v457 = vadd.f32 %v456, %v427
        %v458 = vadd.f32 %v457, %v432
        %v459 = vadd.f32 %v458, %v435
        %v460 = vadd.f32 %v459, %v440
        %v461 = vadd.f32 %v460, %v443
        %v462 = vrot.slane %v461, 4
        %v463 = vadd.f32 %v461, %v462
        %v464 = vrot.slane %v463, 2
        %v465 = vadd.f32 %v463, %v464
        %v466 = vrot.slane %v465, 1
        %v467 = vadd.f32 %v465, %v466
        %v468 = vadd.f32 %v446, %v467
        %469 = vst [vmem:[%s226] sm:$0x1] %v468
        %v470 = vld [vmem:[%s233] sm:$0x1]
        %v471 = vmul.f32 %v384, %v384
        %v472 = vmul.f32 %v387, %v387
        %v473 = vmul.f32 %v392, %v392
        %v474 = vmul.f32 %v395, %v395
        %v475 = vmul.f32 %v400, %v400
        %v476 = vmul.f32 %v403, %v403
        %v477 = vmul.f32 %v408, %v408
        %v478 = vmul.f32 %v411, %v411
        %v479 = vmul.f32 %v416, %v416
        %v480 = vmul.f32 %v419, %v419
        %v481 = vmul.f32 %v424, %v424
        %v482 = vmul.f32 %v427, %v427
        %v483 = vmul.f32 %v432, %v432
        %v484 = vmul.f32 %v435, %v435
        %v485 = vmul.f32 %v440, %v440
        %v486 = vmul.f32 %v443, %v443
        %v487 = vadd.f32 %v471, %v472
        %v488 = vadd.f32 %v487, %v473
        %v489 = vadd.f32 %v488, %v474
        %v490 = vadd.f32 %v489, %v475
        %v491 = vadd.f32 %v490, %v476
        %v492 = vadd.f32 %v491, %v477
        %v493 = vadd.f32 %v492, %v478
        %v494 = vadd.f32 %v493, %v479
        %v495 = vadd.f32 %v494, %v480
        %v496 = vadd.f32 %v495, %v481
        %v497 = vadd.f32 %v496, %v482
        %v498 = vadd.f32 %v497, %v483
        %v499 = vadd.f32 %v498, %v484
        %v500 = vadd.f32 %v499, %v485
        %v501 = vadd.f32 %v500, %v486
        %v502 = vrot.slane %v501, 4
        %v503 = vadd.f32 %v501, %v502
        %v504 = vrot.slane %v503, 2
        %v505 = vadd.f32 %v503, %v504
        %v506 = vrot.slane %v505, 1
        %v507 = vadd.f32 %v505, %v506
        %v508 = vadd.f32 %v470, %v507
        %509 = vst [vmem:[%s233] sm:$0x1] %v508
        %s510 = sand.u32 %s96, 1
        %s511 = scalar_lea.sflag [#allocation4], %s510
        %s512 = sand.u32 %s96, 1
        %s513 = smul.addr %s512, 8
        %s514 = scalar_lea.vmem [#allocation7], %s513
        %s515 = sand.u32 %s122, 1
        %s516 = scalar_lea.sflag [#allocation9], %s515
        %s517 = sand.u32 %s122, 1
        %s518 = smul.addr %s517, 8
        %s519 = scalar_lea.vmem [#allocation8], %s518
        // Predicated region
        $region41: #{tpu_custom_call.1} parent=27 // pred_check
          %p520 = pneg %p106
        $region42: #{tpu_custom_call.1} parent=27 // pred_check_branch
          %522 = sbr.rel (%p520) target = $region44
        $region43: #{tpu_custom_call.1} parent=27 // pred_region
          %s524 = ssub.s32 128, 128
          %525 = vsyncadd %s511, %s524
          %s526 = smul.addr %s29, 128
          %s527 = scalar_lea.hbm %s2, %s526
          %s529 = sshll.u32 %s514, 4
          %s530 = int_to_ptr.vmem [resolvable:$true] %s529
          %532 = dma.vmem_to_hbm [thread:$0]  %s530, 128, %s527, %s511
        $region44: #{tpu_custom_call.1} parent=27 // pred_fallthru
          _
        // Predicated region
        $region45: #{tpu_custom_call.1} parent=27 // pred_check
          %p533 = pneg %p132
        $region46: #{tpu_custom_call.1} parent=27 // pred_check_branch
          %535 = sbr.rel (%p533) target = $region48
        $region47: #{tpu_custom_call.1} parent=27 // pred_region
          %s537 = ssub.s32 128, 128
          %538 = vsyncadd %s516, %s537
          %s539 = smul.addr %s29, 128
          %s540 = scalar_lea.hbm %s3, %s539
          %s542 = sshll.u32 %s519, 4
          %s543 = int_to_ptr.vmem [resolvable:$true] %s542
          %545 = dma.vmem_to_hbm [thread:$0]  %s543, 128, %s540, %s516
        $region48: #{tpu_custom_call.1} parent=27 // pred_fallthru
          _
      $region28: #{tpu_custom_call.1} parent=5 // pred_fallthru
        _
      %p546 = scmp.le.s32.totalorder 2, %s20
      // Predicated region
      $region49: #{tpu_custom_call.1} parent=5 // pred_check
        %p547 = pneg %p546
      $region50: #{tpu_custom_call.1} parent=5 // pred_check_branch
        %549 = sbr.rel (%p547) target = $region52
      $region51: #{tpu_custom_call.1} parent=5 // pred_region
        %s550 = ssub.s32 %s20, 2
        // Predicated region
        $region53: #{tpu_custom_call.1} parent=51 // pred_check
          %p551 = pneg %p112
        $region54: #{tpu_custom_call.1} parent=51 // pred_check_branch
          %553 = sbr.rel (%p551) target = $region56
        $region55: #{tpu_custom_call.1} parent=51 // pred_region
          %s554 = sand.u32 %s97, 1
          %s555 = scalar_lea.sflag [#allocation4], %s554
          %s556 = sand.u32 %s97, 1
          %s557 = smul.addr %s556, 8
          %s558 = scalar_lea.vmem [#allocation7], %s557
          %559 = dma.done %s555, 128
        $region56: #{tpu_custom_call.1} parent=51 // pred_fallthru
          _
        // Predicated region
        $region57: #{tpu_custom_call.1} parent=51 // pred_check
          %p560 = pneg %p138
        $region58: #{tpu_custom_call.1} parent=51 // pred_check_branch
          %562 = sbr.rel (%p560) target = $region60
        $region59: #{tpu_custom_call.1} parent=51 // pred_region
          %s563 = sand.u32 %s123, 1
          %s564 = scalar_lea.sflag [#allocation9], %s563
          %s565 = sand.u32 %s123, 1
          %s566 = smul.addr %s565, 8
          %s567 = scalar_lea.vmem [#allocation8], %s566
          %568 = dma.done %s564, 128
        $region60: #{tpu_custom_call.1} parent=51 // pred_fallthru
          _
      $region52: #{tpu_custom_call.1} parent=5 // pred_fallthru
        _
    $region6: #{tpu_custom_call.1} parent=1 // loop_footer
      %s24 = sadd.s32 1, %s20
    $region7: #{tpu_custom_call.1} parent=1 // loop_footer_branch
      %19 = sbr.rel target = $region3
    $region8: #{tpu_custom_call.1} parent=1 // loop_exit
      _
    %569 = vsyncpa [#allocation3], 1
    %s570 = scalar_lea.sflag [#allocation3], 1
    %571 = vsyncpa %s570, 1
    %572 = vsyncpa [#allocation6], 1
    %573 = vsyncpa [#allocation4], 1
    %s574 = scalar_lea.sflag [#allocation4], 1
    %575 = vsyncpa %s574, 1
    %576 = vsyncpa [#allocation9], 1
    %s577 = scalar_lea.sflag [#allocation9], 1
    %578 = vsyncpa %s577, 1

</llo_original>
